<compile_context>
chip_gen: v7x
topology: tpu7x:2x2x1
jax: 0.10.0
libtpu: 0.0.40
codegen_flags: <defaults>
</compile_context>

<pallas_src>
import math

import jax
import jax.numpy as jnp
from jax import lax
from jax.experimental import pallas as pl
from jax.experimental.pallas import tpu as pltpu

D_MODEL = 32
NUM_HEADS = 8
D_K = D_MODEL // NUM_HEADS
SEQ_LEN = 8
BATCH = 2
LN_EPS = 1e-5

M_ROWS = BATCH * SEQ_LEN                 # 16  (B*S) query rows
C_COLS = BATCH * NUM_HEADS * SEQ_LEN     # 128 (B*H*S) key/value "columns"
SCALE = 1.0 / math.sqrt(D_K)

# Row offsets inside the narrow (.., 32) input slab.
ROW_X = 0
ROW_XREP = ROW_X + M_ROWS                # 16
ROW_W = ROW_XREP + C_COLS                # 144  (4 stacked (32,32) weights)
ROW_HMASK = ROW_W + 4 * D_MODEL          # 272
ROW_PAR = ROW_HMASK + C_COLS             # 400  (bo; gamma; beta)
N_NARROW = ROW_PAR + 3                   # 403

# Row offsets inside the wide (.., 128) input slab.
ROW_XREPT = 0
ROW_HMASKT = ROW_XREPT + D_MODEL         # 32
ROW_BBIAS = ROW_HMASKT + D_MODEL         # 64
N_WIDE = ROW_BBIAS + M_ROWS              # 80


def mha_kernel(narrow_ref, wide_ref, o_ref):
    f32 = jnp.float32

    # ---- static slab views (no in-kernel relayouts / transposes) ----
    x = narrow_ref[ROW_X:ROW_X + M_ROWS, :]                            # (16, 32)
    xrep = narrow_ref[ROW_XREP:ROW_XREP + C_COLS, :]                   # (128, 32)
    wq_s = narrow_ref[ROW_W + 0 * D_MODEL:ROW_W + 1 * D_MODEL, :]      # (32, 32) Wq^T * SCALE
    wk_tt = narrow_ref[ROW_W + 1 * D_MODEL:ROW_W + 2 * D_MODEL, :]     # (32, 32) (Wk^T)^T
    wv_t = narrow_ref[ROW_W + 2 * D_MODEL:ROW_W + 3 * D_MODEL, :]      # (32, 32) Wv^T
    wo_t = narrow_ref[ROW_W + 3 * D_MODEL:ROW_W + 4 * D_MODEL, :]      # (32, 32) Wo^T
    head_mask = narrow_ref[ROW_HMASK:ROW_HMASK + C_COLS, :]            # (128, 32)
    par = narrow_ref[ROW_PAR:ROW_PAR + 3, :]                           # (3, 32) [bo; gamma; beta]

    xrep_t = wide_ref[ROW_XREPT:ROW_XREPT + D_MODEL, :]                # (32, 128)
    head_mask_t = wide_ref[ROW_HMASKT:ROW_HMASKT + D_MODEL, :]         # (32, 128)
    batch_bias = wide_ref[ROW_BBIAS:ROW_BBIAS + M_ROWS, :]             # (16, 128), 0 / -1e9

    # ---- projections (block-diagonal "head-masked" K~ / V~ formulation) ----
    q = jnp.dot(x, wq_s, preferred_element_type=f32)                            # (16, 32)
    k_t = jnp.dot(wk_tt, xrep_t, preferred_element_type=f32) * head_mask_t      # (32, 128)
    v_m = jnp.dot(xrep, wv_t, preferred_element_type=f32) * head_mask           # (128, 32)

    # All heads' / all batches' scores lane-dense in one matmul; cross-batch
    # columns get -1e9 additively (exp underflows to exactly 0).
    s = jnp.dot(q, k_t, preferred_element_type=f32) + batch_bias                # (16, 128)

    # Softmax numerator with a per-row max (== per-batch max because of the
    # additive bias).  Per-(batch,head) max omitted: segment logit spreads here
    # are O(1), far from exp underflow.
    m = jnp.max(s, axis=-1, keepdims=True)
    p = jnp.exp(s - m)                                                          # (16, 128)

    # Deferred normalization: unnormalized head-concatenated output plus the
    # per-segment denominator expanded straight to (16,32) by reusing head_mask.
    attn_u = jnp.dot(p, v_m, preferred_element_type=f32)                        # (16, 32)
    denom = jnp.dot(p, head_mask, preferred_element_type=f32)                   # (16, 32)
    attn = attn_u / denom                                                       # exact softmax

    # Output projection (+bias), dropout = identity, residual add.
    out = jnp.dot(attn, wo_t, preferred_element_type=f32) + par[0:1, :]
    y = x + out

    # LayerNorm over the hidden dim.
    mean = jnp.sum(y, axis=-1, keepdims=True) * (1.0 / D_MODEL)
    yc = y - mean
    var = jnp.sum(yc * yc, axis=-1, keepdims=True) * (1.0 / D_MODEL)
    y_hat = yc * lax.rsqrt(var + LN_EPS)
    o_ref[...] = (y_hat * par[1:2, :] + par[2:3, :]).astype(o_ref.dtype)


@jax.jit
def mha_forward(x, wq_t, wk_t, wv_t, wo_t, bo, gamma, beta):
    B, S, D = x.shape
    M = B * S
    C = B * NUM_HEADS * S

    x_flat = x.reshape(M, D)
    # Row-replicated x: row (b*H + h)*S + t holds x[b, t, :]; plus its transpose.
    x_rep = jnp.broadcast_to(x[:, None, :, :], (B, NUM_HEADS, S, D)).reshape(C, D)
    x_rep_t = x_rep.T                                                   # (D, C)

    # ---- constants hoisted out of the kernel (folded by XLA under jit) ----
    col = jnp.arange(C)
    head_of_col = (col // S) % NUM_HEADS                                # (C,)
    head_of_d = jnp.arange(D) // D_K                                    # (D,)
    head_mask = (head_of_col[:, None] == head_of_d[None, :]).astype(jnp.float32)   # (C, D)
    head_mask_t = head_mask.T                                           # (D, C)

    row_b = jnp.arange(M) // S
    col_b = col // (NUM_HEADS * S)
    batch_bias = jnp.where(row_b[:, None] == col_b[None, :], 0.0, -1e9).astype(jnp.float32)  # (M, C)

    # SCALE folded into Wq^T; Wk pre-arranged so K~ comes out in (D, C) with an
    # NN matmul (no in-kernel transpose).
    w_stack = jnp.concatenate([wq_t * SCALE, wk_t.T, wv_t, wo_t], axis=0)   # (4D, D)
    params = jnp.stack([bo, gamma, beta], axis=0)                           # (3, D)

    narrow = jnp.concatenate([x_flat, x_rep, w_stack, head_mask, params], axis=0)   # (403, 32)
    wide = jnp.concatenate([x_rep_t, head_mask_t, batch_bias], axis=0)               # (80, 128)

    def full(shape):
        return pl.BlockSpec(shape, lambda i: (0, 0))

    out_flat = pl.pallas_call(
        mha_kernel,
        out_shape=jax.ShapeDtypeStruct((M, D), x.dtype),
        grid_spec=pltpu.PrefetchScalarGridSpec(
            num_scalar_prefetch=0,
            grid=(1,),
            in_specs=[
                full((N_NARROW, D)),      # narrow slab (.., 32)
                full((N_WIDE, C)),        # wide slab   (.., 128)
            ],
            out_specs=full((M, D)),
        ),
        compiler_params=pltpu.CompilerParams(
            dimension_semantics=("arbitrary",)),
    )(narrow, wide)
    return out_flat.reshape(B, S, D)


def xavier_uniform(key, fan_in, fan_out):
    limit = math.sqrt(6.0 / (fan_in + fan_out))
    return jax.random.uniform(key, (fan_out, fan_in), jnp.float32, -limit, limit)


def reference_forward(x, wq_t, wk_t, wv_t, wo_t, bo, gamma, beta):
    """Pure-JAX reference mirroring the PyTorch forward (dropout = identity)."""
    B, S, D = x.shape
    q = (x @ wq_t).reshape(B, S, NUM_HEADS, D_K).transpose(0, 2, 1, 3)
    k = (x @ wk_t).reshape(B, S, NUM_HEADS, D_K).transpose(0, 2, 1, 3)
    v = (x @ wv_t).reshape(B, S, NUM_HEADS, D_K).transpose(0, 2, 1, 3)
    scores = jnp.einsum("bhqd,bhkd->bhqk", q, k) / math.sqrt(D_K)
    p = jax.nn.softmax(scores, axis=-1)
    attn = jnp.einsum("bhqk,bhkd->bhqd", p, v)
    attn = attn.transpose(0, 2, 1, 3).reshape(B, S, D)
    out = attn @ wo_t + bo
    y = x + out
    mean = jnp.mean(y, axis=-1, keepdims=True)
    var = jnp.mean((y - mean) ** 2, axis=-1, keepdims=True)
    return (y - mean) / jnp.sqrt(var + LN_EPS) * gamma + beta


if __name__ == "__main__":
    key = jax.random.PRNGKey(0)
    kx, kq, kk, kv, ko, kb = jax.random.split(key, 6)

    x = jax.random.normal(kx, (BATCH, SEQ_LEN, D_MODEL), jnp.float32)

    # Deterministic parameter init (xavier_uniform like _init_weights), PyTorch (out, in) layout.
    wq = xavier_uniform(kq, D_MODEL, D_MODEL)
    wk = xavier_uniform(kk, D_MODEL, D_MODEL)
    wv = xavier_uniform(kv, D_MODEL, D_MODEL)
    wo = xavier_uniform(ko, D_MODEL, D_MODEL)
    bound = 1.0 / math.sqrt(D_MODEL)
    bo = jax.random.uniform(kb, (D_MODEL,), jnp.float32, -bound, bound)
    gamma = jnp.ones((D_MODEL,), jnp.float32)
    beta = jnp.zeros((D_MODEL,), jnp.float32)

    # Pre-transpose to (D_in, D_out) so y = x @ W_t == nn.Linear(x).
    wq_t, wk_t, wv_t, wo_t = wq.T, wk.T, wv.T, wo.T

    out = mha_forward(x, wq_t, wk_t, wv_t, wo_t, bo, gamma, beta)
    out = jax.block_until_ready(out)

    ref = reference_forward(x, wq_t, wk_t, wv_t, wo_t, bo, gamma, beta)
    assert out.shape == (BATCH, SEQ_LEN, D_MODEL)
    # Exact-division softmax + all-f32 math: tight tolerance vs. the reference.
    assert jnp.allclose(out, ref, atol=1e-4, rtol=1e-4), "mismatch vs reference"

    print("KERNEL_OK")
</pallas_src>

<mosaic_0001>
module attributes {stable_mosaic.version = 11 : i64} {
  func.func @mha_kernel(%arg0: i32, %arg1: memref<403x32xf32, #tpu.memory_space<vmem>>, %arg2: memref<80x128xf32, #tpu.memory_space<vmem>>, %arg3: memref<16x32xf32, #tpu.memory_space<vmem>>) attributes {dimension_semantics = [#tpu.dimension_semantics<arbitrary>], iteration_bounds = array<i64: 1>, scalar_prefetch = 0 : i64, scratch_operands = 0 : i64, tpu.core_type = #tpu.core_type<tc>, window_params = [{pipeline_mode = #tpu.pipeline_mode<synchronous>, transform_indices = @transform_0, window_bounds = array<i64: 403, 32>}, {pipeline_mode = #tpu.pipeline_mode<synchronous>, transform_indices = @transform_1, window_bounds = array<i64: 80, 128>}, {pipeline_mode = #tpu.pipeline_mode<synchronous>, transform_indices = @transform_2, window_bounds = array<i64: 16, 32>}]} {
    %c0 = arith.constant 0 : index
    %c0_0 = arith.constant 0 : index
    %0 = vector.load %arg1[%c0, %c0_0] : memref<403x32xf32, #tpu.memory_space<vmem>>, vector<16x32xf32>
    %c16 = arith.constant 16 : index
    %c0_1 = arith.constant 0 : index
    %1 = vector.load %arg1[%c16, %c0_1] : memref<403x32xf32, #tpu.memory_space<vmem>>, vector<128x32xf32>
    %c144 = arith.constant 144 : index
    %c0_2 = arith.constant 0 : index
    %2 = vector.load %arg1[%c144, %c0_2] : memref<403x32xf32, #tpu.memory_space<vmem>>, vector<32x32xf32>
    %c176 = arith.constant 176 : index
    %c0_3 = arith.constant 0 : index
    %3 = vector.load %arg1[%c176, %c0_3] : memref<403x32xf32, #tpu.memory_space<vmem>>, vector<32x32xf32>
    %c208 = arith.constant 208 : index
    %c0_4 = arith.constant 0 : index
    %4 = vector.load %arg1[%c208, %c0_4] : memref<403x32xf32, #tpu.memory_space<vmem>>, vector<32x32xf32>
    %c240 = arith.constant 240 : index
    %c0_5 = arith.constant 0 : index
    %5 = vector.load %arg1[%c240, %c0_5] : memref<403x32xf32, #tpu.memory_space<vmem>>, vector<32x32xf32>
    %c272 = arith.constant 272 : index
    %c0_6 = arith.constant 0 : index
    %6 = vector.load %arg1[%c272, %c0_6] : memref<403x32xf32, #tpu.memory_space<vmem>>, vector<128x32xf32>
    %c400 = arith.constant 400 : index
    %c0_7 = arith.constant 0 : index
    %7 = vector.load %arg1[%c400, %c0_7] : memref<403x32xf32, #tpu.memory_space<vmem>>, vector<3x32xf32>
    %c0_8 = arith.constant 0 : index
    %c0_9 = arith.constant 0 : index
    %8 = vector.load %arg2[%c0_8, %c0_9] : memref<80x128xf32, #tpu.memory_space<vmem>>, vector<32x128xf32>
    %c32 = arith.constant 32 : index
    %c0_10 = arith.constant 0 : index
    %9 = vector.load %arg2[%c32, %c0_10] : memref<80x128xf32, #tpu.memory_space<vmem>>, vector<32x128xf32>
    %c64 = arith.constant 64 : index
    %c0_11 = arith.constant 0 : index
    %10 = vector.load %arg2[%c64, %c0_11] : memref<80x128xf32, #tpu.memory_space<vmem>>, vector<16x128xf32>
    %cst = arith.constant dense<0.000000e+00> : vector<16x32xf32>
    %11 = tpu.matmul %0, %2, %cst {dimension_numbers = #tpu.dot_dimension_numbers<[1], [0], [0], [1], [0, 0, 1, 1], [], []>} : vector<16x32xf32>, vector<32x32xf32>, vector<16x32xf32> -> vector<16x32xf32>
    %cst_12 = arith.constant dense<0.000000e+00> : vector<32x128xf32>
    %12 = tpu.matmul %3, %8, %cst_12 {dimension_numbers = #tpu.dot_dimension_numbers<[1], [0], [0], [1], [0, 0, 1, 1], [], []>} : vector<32x32xf32>, vector<32x128xf32>, vector<32x128xf32> -> vector<32x128xf32>
    %13 = arith.mulf %12, %9 : vector<32x128xf32>
    %cst_13 = arith.constant dense<0.000000e+00> : vector<128x32xf32>
    %14 = tpu.matmul %1, %4, %cst_13 {dimension_numbers = #tpu.dot_dimension_numbers<[1], [0], [0], [1], [0, 0, 1, 1], [], []>} : vector<128x32xf32>, vector<32x32xf32>, vector<128x32xf32> -> vector<128x32xf32>
    %15 = arith.mulf %14, %6 : vector<128x32xf32>
    %cst_14 = arith.constant dense<0.000000e+00> : vector<16x128xf32>
    %16 = tpu.matmul %11, %13, %cst_14 {dimension_numbers = #tpu.dot_dimension_numbers<[1], [0], [0], [1], [0, 0, 1, 1], [], []>} : vector<16x32xf32>, vector<32x128xf32>, vector<16x128xf32> -> vector<16x128xf32>
    %17 = arith.addf %16, %10 : vector<16x128xf32>
    %cst_15 = arith.constant dense<0xFF800000> : vector<16xf32>
    %18 = vector.multi_reduction <maximumf>, %17, %cst_15 [1] : vector<16x128xf32> to vector<16xf32>
    %19 = vector.shape_cast %18 : vector<16xf32> to vector<16x1xf32>
    %20 = vector.broadcast %19 : vector<16x1xf32> to vector<16x128xf32>
    %21 = arith.subf %17, %20 : vector<16x128xf32>
    %22 = math.exp %21 : vector<16x128xf32>
    %cst_16 = arith.constant dense<0.000000e+00> : vector<16x32xf32>
    %23 = tpu.matmul %22, %15, %cst_16 {dimension_numbers = #tpu.dot_dimension_numbers<[1], [0], [0], [1], [0, 0, 1, 1], [], []>} : vector<16x128xf32>, vector<128x32xf32>, vector<16x32xf32> -> vector<16x32xf32>
    %cst_17 = arith.constant dense<0.000000e+00> : vector<16x32xf32>
    %24 = tpu.matmul %22, %6, %cst_17 {dimension_numbers = #tpu.dot_dimension_numbers<[1], [0], [0], [1], [0, 0, 1, 1], [], []>} : vector<16x128xf32>, vector<128x32xf32>, vector<16x32xf32> -> vector<16x32xf32>
    %25 = arith.divf %23, %24 : vector<16x32xf32>
    %cst_18 = arith.constant dense<0.000000e+00> : vector<16x32xf32>
    %26 = tpu.matmul %25, %5, %cst_18 {dimension_numbers = #tpu.dot_dimension_numbers<[1], [0], [0], [1], [0, 0, 1, 1], [], []>} : vector<16x32xf32>, vector<32x32xf32>, vector<16x32xf32> -> vector<16x32xf32>
    %27 = vector.extract_strided_slice %7 {offsets = [0, 0], sizes = [1, 32], strides = [1, 1]} : vector<3x32xf32> to vector<1x32xf32>
    %28 = vector.broadcast %27 : vector<1x32xf32> to vector<16x32xf32>
    %29 = arith.addf %26, %28 : vector<16x32xf32>
    %30 = arith.addf %0, %29 : vector<16x32xf32>
    %cst_19 = arith.constant dense<0.000000e+00> : vector<16xf32>
    %31 = vector.multi_reduction <add>, %30, %cst_19 [1] : vector<16x32xf32> to vector<16xf32>
    %32 = vector.shape_cast %31 : vector<16xf32> to vector<16x1xf32>
    %cst_20 = arith.constant 3.125000e-02 : f32
    %33 = vector.broadcast %cst_20 : f32 to vector<16x1xf32>
    %34 = arith.mulf %32, %33 : vector<16x1xf32>
    %35 = vector.broadcast %34 : vector<16x1xf32> to vector<16x32xf32>
    %36 = arith.subf %30, %35 : vector<16x32xf32>
    %37 = arith.mulf %36, %36 : vector<16x32xf32>
    %cst_21 = arith.constant dense<0.000000e+00> : vector<16xf32>
    %38 = vector.multi_reduction <add>, %37, %cst_21 [1] : vector<16x32xf32> to vector<16xf32>
    %39 = vector.shape_cast %38 : vector<16xf32> to vector<16x1xf32>
    %cst_22 = arith.constant 3.125000e-02 : f32
    %40 = vector.broadcast %cst_22 : f32 to vector<16x1xf32>
    %41 = arith.mulf %39, %40 : vector<16x1xf32>
    %cst_23 = arith.constant 9.99999974E-6 : f32
    %42 = vector.broadcast %cst_23 : f32 to vector<16x1xf32>
    %43 = arith.addf %41, %42 : vector<16x1xf32>
    %44 = math.rsqrt %43 : vector<16x1xf32>
    %45 = vector.broadcast %44 : vector<16x1xf32> to vector<16x32xf32>
    %46 = arith.mulf %36, %45 : vector<16x32xf32>
    %47 = vector.extract_strided_slice %7 {offsets = [1, 0], sizes = [1, 32], strides = [1, 1]} : vector<3x32xf32> to vector<1x32xf32>
    %48 = vector.broadcast %47 : vector<1x32xf32> to vector<16x32xf32>
    %49 = arith.mulf %46, %48 : vector<16x32xf32>
    %50 = vector.extract_strided_slice %7 {offsets = [2, 0], sizes = [1, 32], strides = [1, 1]} : vector<3x32xf32> to vector<1x32xf32>
    %51 = vector.broadcast %50 : vector<1x32xf32> to vector<16x32xf32>
    %52 = arith.addf %49, %51 : vector<16x32xf32>
    %c0_24 = arith.constant 0 : index
    %c0_25 = arith.constant 0 : index
    %53 = vector.load %arg3[%c0_24, %c0_25] : memref<16x32xf32, #tpu.memory_space<vmem>>, vector<16x32xf32>
    tpu.vector_store %arg3[%c0_24, %c0_25], %52 {strides = array<i32>} : memref<16x32xf32, #tpu.memory_space<vmem>>, vector<16x32xf32>,
    return
  }
  func.func @transform_0(%arg0: i32) -> (i32, i32) {
    %c0_i32 = arith.constant 0 : i32
    %c0_i32_0 = arith.constant 0 : i32
    %c0_i32_1 = arith.constant 0 : i32
    return %c0_i32, %c0_i32_0 : i32, i32
  }
  func.func @transform_1(%arg0: i32) -> (i32, i32) {
    %c0_i32 = arith.constant 0 : i32
    %c0_i32_0 = arith.constant 0 : i32
    %c0_i32_1 = arith.constant 0 : i32
    return %c0_i32, %c0_i32_0 : i32, i32
  }
  func.func @transform_2(%arg0: i32) -> (i32, i32) {
    %c0_i32 = arith.constant 0 : i32
    %c0_i32_0 = arith.constant 0 : i32
    %c0_i32_1 = arith.constant 0 : i32
    return %c0_i32, %c0_i32_0 : i32, i32
  }
}

</mosaic_0001>

<llo_original>
// kernel: mha_forward.1
$region0: #{mha_forward.1}
  #allocation0 [shape = 'u32[]', space=smem, size = 0x4, offset = 0x4, fixed_abs, tag = 'smem constant byte address 0x4 - core index']
  #allocation1 [shape = 'u32[144,128]{1,0:T(1,128)}', space=vmem, size = 0x12000, scoped, tag = 'internal scratch']
  %s0 = inlined_call_operand.vmem [shape: f32[403,32], index: 0, kind: input, shape index: {}]
  %s1 = inlined_call_operand.vmem [shape: f32[80,128], index: 1, kind: input, shape index: {}]
  %s2 = inlined_call_operand.hbm [shape: f32[16,32], index: 2, kind: output, shape index: {}]
  %s3 = sld [smem:[#allocation0]]
  $region18: #{mha_forward.1} parent=0
    _
  %s5 = ssub.s32 1, %s3
  %s6 = scalar_select 0, %s5, %s3
  $region1: #{mha_forward.1} parent=0
    #allocation2 [shape = 'u8[8192]{0}', space=vmem, size = 0x2000, scoped, tag = 'output window, operand 0, single buffered']
    #allocation3 [shape = 's32[1]{0}', space=sflag, size = 0x4, scoped, tag = 'scoped memory for mha_forward.1']
    %7 = vsyncpa [#allocation3], 0
    // Predicated region
    $region2: #{mha_forward.1} parent=1 // pred_check
      _
    $region3: #{mha_forward.1} parent=1 // pred_check_branch
      %9 = sbr.rel (0) target = $region5
    $region4: #{mha_forward.1} parent=1 // pred_region
      _
    $region5: #{mha_forward.1} parent=1 // pred_fallthru
      _
    // Predicated region
    $region6: #{mha_forward.1} parent=1 // pred_check
      _
    $region7: #{mha_forward.1} parent=1 // pred_check_branch
      %11 = sbr.rel (0) target = $region9
    $region8: #{mha_forward.1} parent=1 // pred_region
      _
    $region9: #{mha_forward.1} parent=1 // pred_fallthru
      _
    %v12 = vld [vmem:[%s0] sm:$0xff]
    %v13 = vld [vmem:[%s0 + $0x8] sm:$0xff]
    %v14 = vld [vmem:[%s0 + $0x10] sm:$0xff]
    %v15 = vld [vmem:[%s0 + $0x18] sm:$0xff]
    %v16 = vld [vmem:[%s0 + $0x20] sm:$0xff]
    %v17 = vld [vmem:[%s0 + $0x28] sm:$0xff]
    %v18 = vld [vmem:[%s0 + $0x30] sm:$0xff]
    %v19 = vld [vmem:[%s0 + $0x38] sm:$0xff]
    %v20 = vld [vmem:[%s0 + $0x40] sm:$0xff]
    %v21 = vld [vmem:[%s0 + $0x48] sm:$0xff]
    %v22 = vld [vmem:[%s0 + $0x50] sm:$0xff]
    %v23 = vld [vmem:[%s0 + $0x58] sm:$0xff]
    %v24 = vld [vmem:[%s0 + $0x60] sm:$0xff]
    %v25 = vld [vmem:[%s0 + $0x68] sm:$0xff]
    %v26 = vld [vmem:[%s0 + $0x70] sm:$0xff]
    %v27 = vld [vmem:[%s0 + $0x78] sm:$0xff]
    %v28 = vld [vmem:[%s0 + $0x80] sm:$0xff]
    %v29 = vld [vmem:[%s0 + $0x88] sm:$0xff]
    %v30 = vld [vmem:[%s0 + $0x90] sm:$0xff]
    %v31 = vld [vmem:[%s0 + $0x98] sm:$0xff]
    %v32 = vld [vmem:[%s0 + $0xa0] sm:$0xff]
    %v33 = vld [vmem:[%s0 + $0xa8] sm:$0xff]
    %v34 = vld [vmem:[%s0 + $0xb0] sm:$0xff]
    %v35 = vld [vmem:[%s0 + $0xb8] sm:$0xff]
    %v36 = vld [vmem:[%s0 + $0xc0] sm:$0xff]
    %v37 = vld [vmem:[%s0 + $0xc8] sm:$0xff]
    %v38 = vld [vmem:[%s0 + $0xd0] sm:$0xff]
    %v39 = vld [vmem:[%s0 + $0xd8] sm:$0xff]
    %v40 = vld [vmem:[%s0 + $0xe0] sm:$0xff]
    %v41 = vld [vmem:[%s0 + $0xe8] sm:$0xff]
    %v42 = vld [vmem:[%s0 + $0xf0] sm:$0xff]
    %v43 = vld [vmem:[%s0 + $0xf8] sm:$0xff]
    %v44 = vld [vmem:[%s0 + $0x100] sm:$0xff]
    %v45 = vld [vmem:[%s0 + $0x108] sm:$0xff]
    %v46 = vld [vmem:[%s0 + $0x110] sm:$0xff]
    %v47 = vld [vmem:[%s0 + $0x118] sm:$0xff]
    %v48 = vld [vmem:[%s0 + $0x120] sm:$0xff]
    %v49 = vld [vmem:[%s0 + $0x128] sm:$0xff]
    %v50 = vld [vmem:[%s0 + $0x130] sm:$0xff]
    %v51 = vld [vmem:[%s0 + $0x138] sm:$0xff]
    %v52 = vld [vmem:[%s0 + $0x140] sm:$0xff]
    %v53 = vld [vmem:[%s0 + $0x148] sm:$0xff]
    %v54 = vld [vmem:[%s0 + $0x150] sm:$0xff]
    %v55 = vld [vmem:[%s0 + $0x158] sm:$0xff]
    %v56 = vld [vmem:[%s0 + $0x160] sm:$0xff]
    %v57 = vld [vmem:[%s0 + $0x168] sm:$0xff]
    %v58 = vld [vmem:[%s0 + $0x170] sm:$0xff]
    %v59 = vld [vmem:[%s0 + $0x178] sm:$0xff]
    %v60 = vld [vmem:[%s0 + $0x180] sm:$0xff]
    %v61 = vld [vmem:[%s0 + $0x188] sm:$0xff]
    %v62 = vld [vmem:[%s0 + $0x190] sm:$0x7]
    %v63 = vld [vmem:[%s1] sm:$0xff]
    %v64 = vld [vmem:[%s1 + $0x8] sm:$0xff]
    %v65 = vld [vmem:[%s1 + $0x10] sm:$0xff]
    %v66 = vld [vmem:[%s1 + $0x18] sm:$0xff]
    %v67 = vld [vmem:[%s1 + $0x20] sm:$0xff]
    %v68 = vld [vmem:[%s1 + $0x28] sm:$0xff]
    %v69 = vld [vmem:[%s1 + $0x30] sm:$0xff]
    %v70 = vld [vmem:[%s1 + $0x38] sm:$0xff]
    %v71 = vld [vmem:[%s1 + $0x40] sm:$0xff]
    %v72 = vld [vmem:[%s1 + $0x48] sm:$0xff]
    %vm73 = vcmask 261120
    %v75 = vsel %vm73, %v12, 0
    %v78 = vsel %vm73, %v13, 0
    %80 = vmatprep.subr.mxu0 0.0
    %81 = vmatpush1.msra.mxu0 %v30
    %82 = vmatprep.subr.mxu0 0.0
    %83 = vmatpush1.msra.mxu0 %v31
    %84 = vmatprep.subr.mxu0 0.0
    %85 = vmatpush1.msra.mxu0 %v32
    %86 = vmatprep.subr.mxu0 0.0
    %87 = vmatpush1.msra.mxu0 %v33
    %88 = vmatprep.subr.mxu0 0.0
    %89 = vmatpush1.msra.mxu0 0.0
    %90 = vmatprep.subr.mxu0 0.0
    %91 = vmatpush1.msra.mxu0 0.0
    %92 = vmatprep.subr.mxu0 0.0
    %93 = vmatpush1.msra.mxu0 0.0
    %94 = vmatprep.subr.mxu0 0.0
    %95 = vmatpush1.msra.mxu0 0.0
    %96 = vmatprep.subr.mxu0 0.0
    %97 = vmatpush1.msra.mxu0 0.0
    %98 = vmatprep.subr.mxu0 0.0
    %99 = vmatpush1.msra.mxu0 0.0
    %100 = vmatprep.subr.mxu0 0.0
    %101 = vmatpush1.msra.mxu0 0.0
    %102 = vmatprep.subr.mxu0 0.0
    %103 = vmatpush1.msra.mxu0 0.0
    %104 = vmatprep.subr.mxu0 0.0
    %105 = vmatpush1.msra.mxu0 0.0
    %106 = vmatprep.subr.mxu0 0.0
    %107 = vmatpush1.msra.mxu0 0.0
    %108 = vmatprep.subr.mxu0 0.0
    %109 = vmatpush1.msra.mxu0 0.0
    %110 = vmatprep.subr.mxu0 0.0
    %111 = vmatpush1.msra.mxu0 0.0
    %112 = vmatprep.subr.mxu0 0.0
    %113 = vmatpush1.msra.mxu0 0.0
    %114 = vmatprep.subr.mxu0 0.0
    %115 = vmatpush1.msra.mxu0 0.0
    %116 = vmatprep.subr.mxu0 0.0
    %117 = vmatpush1.msra.mxu0 0.0
    %118 = vmatprep.subr.mxu0 0.0
    %119 = vmatpush1.msra.mxu0 0.0
    %120 = vmatprep.subr.mxu0 0.0
    %121 = vmatpush1.msra.mxu0 0.0
    %122 = vmatprep.subr.mxu0 0.0
    %123 = vmatpush1.msra.mxu0 0.0
    %124 = vmatprep.subr.mxu0 0.0
    %125 = vmatpush1.msra.mxu0 0.0
    %126 = vmatprep.subr.mxu0 0.0
    %127 = vmatpush1.msra.mxu0 0.0
    %128 = vmatprep.subr.mxu0 0.0
    %129 = vmatpush1.msra.mxu0 0.0
    %130 = vmatprep.subr.mxu0 0.0
    %131 = vmatpush1.msra.mxu0 0.0
    %132 = vmatprep.subr.mxu0 0.0
    %133 = vmatpush1.msra.mxu0 0.0
    %134 = vmatprep.subr.mxu0 0.0
    %135 = vmatpush1.msra.mxu0 0.0
    %136 = vmatprep.subr.mxu0 0.0
    %137 = vmatpush1.msra.mxu0 0.0
    %138 = vmatprep.subr.mxu0 0.0
    %139 = vmatpush1.msra.mxu0 0.0
    %140 = vmatprep.subr.mxu0 0.0
    %141 = vmatpush1.msra.mxu0 0.0
    %142 = vmatprep.subr.mxu0 0.0
    %143 = vmatpush1.msra.mxu0 0.0
    %144 = vmatprep.mubr.f32.mxu0 0.0
    %145 = vmatmul.mubr.f32.gmra.mrb[0].mxu0 %v75
    %v146 = vpop.f32.mrb[0].mxu0
    %v147 = vadd.f32 0.0, %v146
    %v148 = vpop.f32.mrb[0].mxu0
    %149 = vmatprep.mubr.f32.mxu0 0.0
    %150 = vmatmul.mubr.f32.gmra.mrb[0].mxu0 %v78
    %v151 = vpop.f32.mrb[0].mxu0
    %v152 = vadd.f32 0.0, %v151
    %v153 = vpop.f32.mrb[0].mxu0
    %154 = vdwg.mxu0
    %v156 = vsel %vm73, %v34, 0
    %v159 = vsel %vm73, %v35, 0
    %v162 = vsel %vm73, %v36, 0
    %v165 = vsel %vm73, %v37, 0
    %167 = vmatprep.subr.mxu0 0.0
    %168 = vmatpush1.msra.mxu0 %v63
    %169 = vmatprep.subr.mxu0 0.0
    %170 = vmatpush1.msra.mxu0 %v64
    %171 = vmatprep.subr.mxu0 0.0
    %172 = vmatpush1.msra.mxu0 %v65
    %173 = vmatprep.subr.mxu0 0.0
    %174 = vmatpush1.msra.mxu0 %v66
    %175 = vmatprep.subr.mxu0 0.0
    %176 = vmatpush1.msra.mxu0 0.0
    %177 = vmatprep.subr.mxu0 0.0
    %178 = vmatpush1.msra.mxu0 0.0
    %179 = vmatprep.subr.mxu0 0.0
    %180 = vmatpush1.msra.mxu0 0.0
    %181 = vmatprep.subr.mxu0 0.0
    %182 = vmatpush1.msra.mxu0 0.0
    %183 = vmatprep.subr.mxu0 0.0
    %184 = vmatpush1.msra.mxu0 0.0
    %185 = vmatprep.subr.mxu0 0.0
    %186 = vmatpush1.msra.mxu0 0.0
    %187 = vmatprep.subr.mxu0 0.0
    %188 = vmatpush1.msra.mxu0 0.0
    %189 = vmatprep.subr.mxu0 0.0
    %190 = vmatpush1.msra.mxu0 0.0
    %191 = vmatprep.subr.mxu0 0.0
    %192 = vmatpush1.msra.mxu0 0.0
    %193 = vmatprep.subr.mxu0 0.0
    %194 = vmatpush1.msra.mxu0 0.0
    %195 = vmatprep.subr.mxu0 0.0
    %196 = vmatpush1.msra.mxu0 0.0
    %197 = vmatprep.subr.mxu0 0.0
    %198 = vmatpush1.msra.mxu0 0.0
    %199 = vmatprep.subr.mxu0 0.0
    %200 = vmatpush1.msra.mxu0 0.0
    %201 = vmatprep.subr.mxu0 0.0
    %202 = vmatpush1.msra.mxu0 0.0
    %203 = vmatprep.subr.mxu0 0.0
    %204 = vmatpush1.msra.mxu0 0.0
    %205 = vmatprep.subr.mxu0 0.0
    %206 = vmatpush1.msra.mxu0 0.0
    %207 = vmatprep.subr.mxu0 0.0
    %208 = vmatpush1.msra.mxu0 0.0
    %209 = vmatprep.subr.mxu0 0.0
    %210 = vmatpush1.msra.mxu0 0.0
    %211 = vmatprep.subr.mxu0 0.0
    %212 = vmatpush1.msra.mxu0 0.0
    %213 = vmatprep.subr.mxu0 0.0
    %214 = vmatpush1.msra.mxu0 0.0
    %215 = vmatprep.subr.mxu0 0.0
    %216 = vmatpush1.msra.mxu0 0.0
    %217 = vmatprep.subr.mxu0 0.0
    %218 = vmatpush1.msra.mxu0 0.0
    %219 = vmatprep.subr.mxu0 0.0
    %220 = vmatpush1.msra.mxu0 0.0
    %221 = vmatprep.subr.mxu0 0.0
    %222 = vmatpush1.msra.mxu0 0.0
    %223 = vmatprep.subr.mxu0 0.0
    %224 = vmatpush1.msra.mxu0 0.0
    %225 = vmatprep.subr.mxu0 0.0
    %226 = vmatpush1.msra.mxu0 0.0
    %227 = vmatprep.subr.mxu0 0.0
    %228 = vmatpush1.msra.mxu0 0.0
    %229 = vmatprep.subr.mxu0 0.0
    %230 = vmatpush1.msra.mxu0 0.0
    %231 = vmatprep.mubr.f32.mxu0 0.0
    %232 = vmatmul.mubr.f32.gmra.mrb[0].mxu0 %v156
    %v233 = vpop.f32.mrb[0].mxu0
    %v234 = vadd.f32 0.0, %v233
    %v235 = vpop.f32.mrb[0].mxu0
    %236 = vmatprep.mubr.f32.mxu0 0.0
    %237 = vmatmul.mubr.f32.gmra.mrb[0].mxu0 %v159
    %v238 = vpop.f32.mrb[0].mxu0
    %v239 = vadd.f32 0.0, %v238
    %v240 = vpop.f32.mrb[0].mxu0
    %241 = vmatprep.mubr.f32.mxu0 0.0
    %242 = vmatmul.mubr.f32.gmra.mrb[0].mxu0 %v162
    %v243 = vpop.f32.mrb[0].mxu0
    %v244 = vadd.f32 0.0, %v243
    %v245 = vpop.f32.mrb[0].mxu0
    %246 = vmatprep.mubr.f32.mxu0 0.0
    %247 = vmatmul.mubr.f32.gmra.mrb[0].mxu0 %v165
    %v248 = vpop.f32.mrb[0].mxu0
    %v249 = vadd.f32 0.0, %v248
    %v250 = vpop.f32.mrb[0].mxu0
    %251 = vdwg.mxu0
    %v252 = vmul.f32 %v234, %v67
    %v253 = vmul.f32 %v239, %v68
    %v254 = vmul.f32 %v244, %v69
    %v255 = vmul.f32 %v249, %v70
    %v257 = vsel %vm73, %v14, 0
    %v260 = vsel %vm73, %v15, 0
    %v263 = vsel %vm73, %v16, 0
    %v266 = vsel %vm73, %v17, 0
    %v269 = vsel %vm73, %v18, 0
    %v272 = vsel %vm73, %v19, 0
    %v275 = vsel %vm73, %v20, 0
    %v278 = vsel %vm73, %v21, 0
    %v281 = vsel %vm73, %v22, 0
    %v284 = vsel %vm73, %v23, 0
    %v287 = vsel %vm73, %v24, 0
    %v290 = vsel %vm73, %v25, 0
    %v293 = vsel %vm73, %v26, 0
    %v296 = vsel %vm73, %v27, 0
    %v299 = vsel %vm73, %v28, 0
    %v302 = vsel %vm73, %v29, 0
    %304 = vmatprep.subr.mxu0 0.0
    %305 = vmatpush1.msra.mxu0 %v38
    %306 = vmatprep.subr.mxu0 0.0
    %307 = vmatpush1.msra.mxu0 %v39
    %308 = vmatprep.subr.mxu0 0.0
    %309 = vmatpush1.msra.mxu0 %v40
    %310 = vmatprep.subr.mxu0 0.0
    %311 = vmatpush1.msra.mxu0 %v41
    %312 = vmatprep.subr.mxu0 0.0
    %313 = vmatpush1.msra.mxu0 0.0
    %314 = vmatprep.subr.mxu0 0.0
    %315 = vmatpush1.msra.mxu0 0.0
    %316 = vmatprep.subr.mxu0 0.0
    %317 = vmatpush1.msra.mxu0 0.0
    %318 = vmatprep.subr.mxu0 0.0
    %319 = vmatpush1.msra.mxu0 0.0
    %320 = vmatprep.subr.mxu0 0.0
    %321 = vmatpush1.msra.mxu0 0.0
    %322 = vmatprep.subr.mxu0 0.0
    %323 = vmatpush1.msra.mxu0 0.0
    %324 = vmatprep.subr.mxu0 0.0
    %325 = vmatpush1.msra.mxu0 0.0
    %326 = vmatprep.subr.mxu0 0.0
    %327 = vmatpush1.msra.mxu0 0.0
    %328 = vmatprep.subr.mxu0 0.0
    %329 = vmatpush1.msra.mxu0 0.0
    %330 = vmatprep.subr.mxu0 0.0
    %331 = vmatpush1.msra.mxu0 0.0
    %332 = vmatprep.subr.mxu0 0.0
    %333 = vmatpush1.msra.mxu0 0.0
    %334 = vmatprep.subr.mxu0 0.0
    %335 = vmatpush1.msra.mxu0 0.0
    %336 = vmatprep.subr.mxu0 0.0
    %337 = vmatpush1.msra.mxu0 0.0
    %338 = vmatprep.subr.mxu0 0.0
    %339 = vmatpush1.msra.mxu0 0.0
    %340 = vmatprep.subr.mxu0 0.0
    %341 = vmatpush1.msra.mxu0 0.0
    %342 = vmatprep.subr.mxu0 0.0
    %343 = vmatpush1.msra.mxu0 0.0
    %344 = vmatprep.subr.mxu0 0.0
    %345 = vmatpush1.msra.mxu0 0.0
    %346 = vmatprep.subr.mxu0 0.0
    %347 = vmatpush1.msra.mxu0 0.0
    %348 = vmatprep.subr.mxu0 0.0
    %349 = vmatpush1.msra.mxu0 0.0
    %350 = vmatprep.subr.mxu0 0.0
    %351 = vmatpush1.msra.mxu0 0.0
    %352 = vmatprep.subr.mxu0 0.0
    %353 = vmatpush1.msra.mxu0 0.0
    %354 = vmatprep.subr.mxu0 0.0
    %355 = vmatpush1.msra.mxu0 0.0
    %356 = vmatprep.subr.mxu0 0.0
    %357 = vmatpush1.msra.mxu0 0.0
    %358 = vmatprep.subr.mxu0 0.0
    %359 = vmatpush1.msra.mxu0 0.0
    %360 = vmatprep.subr.mxu0 0.0
    %361 = vmatpush1.msra.mxu0 0.0
    %362 = vmatprep.subr.mxu0 0.0
    %363 = vmatpush1.msra.mxu0 0.0
    %364 = vmatprep.subr.mxu0 0.0
    %365 = vmatpush1.msra.mxu0 0.0
    %366 = vmatprep.subr.mxu0 0.0
    %367 = vmatpush1.msra.mxu0 0.0
    %368 = vmatprep.mubr.f32.mxu0 0.0
    %369 = vmatmul.mubr.f32.gmra.mrb[0].mxu0 %v257
    %v370 = vpop.f32.mrb[0].mxu0
    %v371 = vadd.f32 0.0, %v370
    %v372 = vpop.f32.mrb[0].mxu0
    %373 = vmatprep.mubr.f32.mxu0 0.0
    %374 = vmatmul.mubr.f32.gmra.mrb[0].mxu0 %v260
    %v375 = vpop.f32.mrb[0].mxu0
    %v376 = vadd.f32 0.0, %v375
    %v377 = vpop.f32.mrb[0].mxu0
    %378 = vmatprep.mubr.f32.mxu0 0.0
    %379 = vmatmul.mubr.f32.gmra.mrb[0].mxu0 %v263
    %v380 = vpop.f32.mrb[0].mxu0
    %v381 = vadd.f32 0.0, %v380
    %v382 = vpop.f32.mrb[0].mxu0
    %383 = vmatprep.mubr.f32.mxu0 0.0
    %384 = vmatmul.mubr.f32.gmra.mrb[0].mxu0 %v266
    %v385 = vpop.f32.mrb[0].mxu0
    %v386 = vadd.f32 0.0, %v385
    %v387 = vpop.f32.mrb[0].mxu0
    %388 = vmatprep.mubr.f32.mxu0 0.0
    %389 = vmatmul.mubr.f32.gmra.mrb[0].mxu0 %v269
    %v390 = vpop.f32.mrb[0].mxu0
    %v391 = vadd.f32 0.0, %v390
    %v392 = vpop.f32.mrb[0].mxu0
    %393 = vmatprep.mubr.f32.mxu0 0.0
    %394 = vmatmul.mubr.f32.gmra.mrb[0].mxu0 %v272
    %v395 = vpop.f32.mrb[0].mxu0
    %v396 = vadd.f32 0.0, %v395
    %v397 = vpop.f32.mrb[0].mxu0
    %398 = vmatprep.mubr.f32.mxu0 0.0
    %399 = vmatmul.mubr.f32.gmra.mrb[0].mxu0 %v275
    %v400 = vpop.f32.mrb[0].mxu0
    %v401 = vadd.f32 0.0, %v400
    %v402 = vpop.f32.mrb[0].mxu0
    %403 = vmatprep.mubr.f32.mxu0 0.0
    %404 = vmatmul.mubr.f32.gmra.mrb[0].mxu0 %v278
    %v405 = vpop.f32.mrb[0].mxu0
    %v406 = vadd.f32 0.0, %v405
    %v407 = vpop.f32.mrb[0].mxu0
    %408 = vmatprep.mubr.f32.mxu0 0.0
    %409 = vmatmul.mubr.f32.gmra.mrb[0].mxu0 %v281
    %v410 = vpop.f32.mrb[0].mxu0
    %v411 = vadd.f32 0.0, %v410
    %v412 = vpop.f32.mrb[0].mxu0
    %413 = vmatprep.mubr.f32.mxu0 0.0
    %414 = vmatmul.mubr.f32.gmra.mrb[0].mxu0 %v284
    %v415 = vpop.f32.mrb[0].mxu0
    %v416 = vadd.f32 0.0, %v415
    %v417 = vpop.f32.mrb[0].mxu0
    %418 = vmatprep.mubr.f32.mxu0 0.0
    %419 = vmatmul.mubr.f32.gmra.mrb[0].mxu0 %v287
    %v420 = vpop.f32.mrb[0].mxu0
    %v421 = vadd.f32 0.0, %v420
    %v422 = vpop.f32.mrb[0].mxu0
    %423 = vmatprep.mubr.f32.mxu0 0.0
    %424 = vmatmul.mubr.f32.gmra.mrb[0].mxu0 %v290
    %v425 = vpop.f32.mrb[0].mxu0
    %v426 = vadd.f32 0.0, %v425
    %v427 = vpop.f32.mrb[0].mxu0
    %428 = vmatprep.mubr.f32.mxu0 0.0
    %429 = vmatmul.mubr.f32.gmra.mrb[0].mxu0 %v293
    %v430 = vpop.f32.mrb[0].mxu0
    %v431 = vadd.f32 0.0, %v430
    %v432 = vpop.f32.mrb[0].mxu0
    %433 = vmatprep.mubr.f32.mxu0 0.0
    %434 = vmatmul.mubr.f32.gmra.mrb[0].mxu0 %v296
    %v435 = vpop.f32.mrb[0].mxu0
    %v436 = vadd.f32 0.0, %v435
    %v437 = vpop.f32.mrb[0].mxu0
    %438 = vmatprep.mubr.f32.mxu0 0.0
    %439 = vmatmul.mubr.f32.gmra.mrb[0].mxu0 %v299
    %v440 = vpop.f32.mrb[0].mxu0
    %v441 = vadd.f32 0.0, %v440
    %v442 = vpop.f32.mrb[0].mxu0
    %443 = vmatprep.mubr.f32.mxu0 0.0
    %444 = vmatmul.mubr.f32.gmra.mrb[0].mxu0 %v302
    %v445 = vpop.f32.mrb[0].mxu0
    %v446 = vadd.f32 0.0, %v445
    %v447 = vpop.f32.mrb[0].mxu0
    %448 = vdwg.mxu0
    %v449 = vmul.f32 %v371, %v46
    %v450 = vmul.f32 %v376, %v47
    %v451 = vmul.f32 %v381, %v48
    %v452 = vmul.f32 %v386, %v49
    %v453 = vmul.f32 %v391, %v50
    %v454 = vmul.f32 %v396, %v51
    %v455 = vmul.f32 %v401, %v52
    %v456 = vmul.f32 %v406, %v53
    %v457 = vmul.f32 %v411, %v54
    %v458 = vmul.f32 %v416, %v55
    %v459 = vmul.f32 %v421, %v56
    %v460 = vmul.f32 %v426, %v57
    %v461 = vmul.f32 %v431, %v58
    %v462 = vmul.f32 %v436, %v59
    %v463 = vmul.f32 %v441, %v60
    %v464 = vmul.f32 %v446, %v61
    %v466 = vsel %vm73, %v147, 0
    %v469 = vsel %vm73, %v152, 0
    %471 = vmatprep.subr.mxu0 0.0
    %472 = vmatpush1.msra.mxu0 %v252
    %473 = vmatprep.subr.mxu0 0.0
    %474 = vmatpush1.msra.mxu0 %v253
    %475 = vmatprep.subr.mxu0 0.0
    %476 = vmatpush1.msra.mxu0 %v254
    %477 = vmatprep.subr.mxu0 0.0
    %478 = vmatpush1.msra.mxu0 %v255
    %479 = vmatprep.subr.mxu0 0.0
    %480 = vmatpush1.msra.mxu0 0.0
    %481 = vmatprep.subr.mxu0 0.0
    %482 = vmatpush1.msra.mxu0 0.0
    %483 = vmatprep.subr.mxu0 0.0
    %484 = vmatpush1.msra.mxu0 0.0
    %485 = vmatprep.subr.mxu0 0.0
    %486 = vmatpush1.msra.mxu0 0.0
    %487 = vmatprep.subr.mxu0 0.0
    %488 = vmatpush1.msra.mxu0 0.0
    %489 = vmatprep.subr.mxu0 0.0
    %490 = vmatpush1.msra.mxu0 0.0
    %491 = vmatprep.subr.mxu0 0.0
    %492 = vmatpush1.msra.mxu0 0.0
    %493 = vmatprep.subr.mxu0 0.0
    %494 = vmatpush1.msra.mxu0 0.0
    %495 = vmatprep.subr.mxu0 0.0
    %496 = vmatpush1.msra.mxu0 0.0
    %497 = vmatprep.subr.mxu0 0.0
    %498 = vmatpush1.msra.mxu0 0.0
    %499 = vmatprep.subr.mxu0 0.0
    %500 = vmatpush1.msra.mxu0 0.0
    %501 = vmatprep.subr.mxu0 0.0
    %502 = vmatpush1.msra.mxu0 0.0
    %503 = vmatprep.subr.mxu0 0.0
    %504 = vmatpush1.msra.mxu0 0.0
    %505 = vmatprep.subr.mxu0 0.0
    %506 = vmatpush1.msra.mxu0 0.0
    %507 = vmatprep.subr.mxu0 0.0
    %508 = vmatpush1.msra.mxu0 0.0
    %509 = vmatprep.subr.mxu0 0.0
    %510 = vmatpush1.msra.mxu0 0.0
    %511 = vmatprep.subr.mxu0 0.0
    %512 = vmatpush1.msra.mxu0 0.0
    %513 = vmatprep.subr.mxu0 0.0
    %514 = vmatpush1.msra.mxu0 0.0
    %515 = vmatprep.subr.mxu0 0.0
    %516 = vmatpush1.msra.mxu0 0.0
    %517 = vmatprep.subr.mxu0 0.0
    %518 = vmatpush1.msra.mxu0 0.0
    %519 = vmatprep.subr.mxu0 0.0
    %520 = vmatpush1.msra.mxu0 0.0
    %521 = vmatprep.subr.mxu0 0.0
    %522 = vmatpush1.msra.mxu0 0.0
    %523 = vmatprep.subr.mxu0 0.0
    %524 = vmatpush1.msra.mxu0 0.0
    %525 = vmatprep.subr.mxu0 0.0
    %526 = vmatpush1.msra.mxu0 0.0
    %527 = vmatprep.subr.mxu0 0.0
    %528 = vmatpush1.msra.mxu0 0.0
    %529 = vmatprep.subr.mxu0 0.0
    %530 = vmatpush1.msra.mxu0 0.0
    %531 = vmatprep.subr.mxu0 0.0
    %532 = vmatpush1.msra.mxu0 0.0
    %533 = vmatprep.subr.mxu0 0.0
    %534 = vmatpush1.msra.mxu0 0.0
    %535 = vmatprep.mubr.f32.mxu0 0.0
    %536 = vmatmul.mubr.f32.gmra.mrb[0].mxu0 %v466
    %v537 = vpop.f32.mrb[0].mxu0
    %v538 = vadd.f32 %v71, %v537
    %v539 = vpop.f32.mrb[0].mxu0
    %540 = vmatprep.mubr.f32.mxu0 0.0
    %541 = vmatmul.mubr.f32.gmra.mrb[0].mxu0 %v469
    %v542 = vpop.f32.mrb[0].mxu0
    %v543 = vadd.f32 %v72, %v542
    %v544 = vpop.f32.mrb[0].mxu0
    %545 = vdwg.mxu0
    %546 = vmax.xlane.f32.xlu0 %v538
    %v547 = vpop.xlane.xlu0 %546
    %548 = vmax.xlane.f32.xlu0 %v543
    %v549 = vpop.xlane.xlu0 %548
    %v550 = vsub.f32 %v538, %v547
    %v551 = vsub.f32 %v543, %v549
    %v552 = vmul.f32 %v550, 1.442695
    %v553 = vpow.pop %v552
    %v554 = vmul.f32 %v551, 1.442695
    %v555 = vpow.pop %v554
    %556 = vmatprep.subr.mxu0 0.0
    %557 = vmatpush1.msra.mxu0 %v449
    %558 = vmatprep.subr.mxu0 0.0
    %559 = vmatpush1.msra.mxu0 %v450
    %560 = vmatprep.subr.mxu0 0.0
    %561 = vmatpush1.msra.mxu0 %v451
    %562 = vmatprep.subr.mxu0 0.0
    %563 = vmatpush1.msra.mxu0 %v452
    %564 = vmatprep.subr.mxu0 0.0
    %565 = vmatpush1.msra.mxu0 %v453
    %566 = vmatprep.subr.mxu0 0.0
    %567 = vmatpush1.msra.mxu0 %v454
    %568 = vmatprep.subr.mxu0 0.0
    %569 = vmatpush1.msra.mxu0 %v455
    %570 = vmatprep.subr.mxu0 0.0
    %571 = vmatpush1.msra.mxu0 %v456
    %572 = vmatprep.subr.mxu0 0.0
    %573 = vmatpush1.msra.mxu0 %v457
    %574 = vmatprep.subr.mxu0 0.0
    %575 = vmatpush1.msra.mxu0 %v458
    %576 = vmatprep.subr.mxu0 0.0
    %577 = vmatpush1.msra.mxu0 %v459
    %578 = vmatprep.subr.mxu0 0.0
    %579 = vmatpush1.msra.mxu0 %v460
    %580 = vmatprep.subr.mxu0 0.0
    %581 = vmatpush1.msra.mxu0 %v461
    %582 = vmatprep.subr.mxu0 0.0
    %583 = vmatpush1.msra.mxu0 %v462
    %584 = vmatprep.subr.mxu0 0.0
    %585 = vmatpush1.msra.mxu0 %v463
    %586 = vmatprep.subr.mxu0 0.0
    %587 = vmatpush1.msra.mxu0 %v464
    %588 = vmatprep.subr.mxu0 0.0
    %589 = vmatpush1.msra.mxu0 0.0
    %590 = vmatprep.subr.mxu0 0.0
    %591 = vmatpush1.msra.mxu0 0.0
    %592 = vmatprep.subr.mxu0 0.0
    %593 = vmatpush1.msra.mxu0 0.0
    %594 = vmatprep.subr.mxu0 0.0
    %595 = vmatpush1.msra.mxu0 0.0
    %596 = vmatprep.subr.mxu0 0.0
    %597 = vmatpush1.msra.mxu0 0.0
    %598 = vmatprep.subr.mxu0 0.0
    %599 = vmatpush1.msra.mxu0 0.0
    %600 = vmatprep.subr.mxu0 0.0
    %601 = vmatpush1.msra.mxu0 0.0
    %602 = vmatprep.subr.mxu0 0.0
    %603 = vmatpush1.msra.mxu0 0.0
    %604 = vmatprep.subr.mxu0 0.0
    %605 = vmatpush1.msra.mxu0 0.0
    %606 = vmatprep.subr.mxu0 0.0
    %607 = vmatpush1.msra.mxu0 0.0
    %608 = vmatprep.subr.mxu0 0.0
    %609 = vmatpush1.msra.mxu0 0.0
    %610 = vmatprep.subr.mxu0 0.0
    %611 = vmatpush1.msra.mxu0 0.0
    %612 = vmatprep.subr.mxu0 0.0
    %613 = vmatpush1.msra.mxu0 0.0
    %614 = vmatprep.subr.mxu0 0.0
    %615 = vmatpush1.msra.mxu0 0.0
    %616 = vmatprep.subr.mxu0 0.0
    %617 = vmatpush1.msra.mxu0 0.0
    %618 = vmatprep.subr.mxu0 0.0
    %619 = vmatpush1.msra.mxu0 0.0
    %620 = vmatprep.mubr.f32.mxu0 0.0
    %621 = vmatmul.mubr.f32.gmra.mrb[0].mxu0 %v553
    %v622 = vpop.f32.mrb[0].mxu0
    %v623 = vadd.f32 0.0, %v622
    %v624 = vpop.f32.mrb[0].mxu0
    %625 = vmatprep.mubr.f32.mxu0 0.0
    %626 = vmatmul.mubr.f32.gmra.mrb[0].mxu0 %v555
    %v627 = vpop.f32.mrb[0].mxu0
    %v628 = vadd.f32 0.0, %v627
    %v629 = vpop.f32.mrb[0].mxu0
    %630 = vdwg.mxu0
    %631 = vmatprep.subr.mxu0 0.0
    %632 = vmatpush1.msra.mxu0 %v46
    %633 = vmatprep.subr.mxu0 0.0
    %634 = vmatpush1.msra.mxu0 %v47
    %635 = vmatprep.subr.mxu0 0.0
    %636 = vmatpush1.msra.mxu0 %v48
    %637 = vmatprep.subr.mxu0 0.0
    %638 = vmatpush1.msra.mxu0 %v49
    %639 = vmatprep.subr.mxu0 0.0
    %640 = vmatpush1.msra.mxu0 %v50
    %641 = vmatprep.subr.mxu0 0.0
    %642 = vmatpush1.msra.mxu0 %v51
    %643 = vmatprep.subr.mxu0 0.0
    %644 = vmatpush1.msra.mxu0 %v52
    %645 = vmatprep.subr.mxu0 0.0
    %646 = vmatpush1.msra.mxu0 %v53
    %647 = vmatprep.subr.mxu0 0.0
    %648 = vmatpush1.msra.mxu0 %v54
    %649 = vmatprep.subr.mxu0 0.0
    %650 = vmatpush1.msra.mxu0 %v55
    %651 = vmatprep.subr.mxu0 0.0
    %652 = vmatpush1.msra.mxu0 %v56
    %653 = vmatprep.subr.mxu0 0.0
    %654 = vmatpush1.msra.mxu0 %v57
    %655 = vmatprep.subr.mxu0 0.0
    %656 = vmatpush1.msra.mxu0 %v58
    %657 = vmatprep.subr.mxu0 0.0
    %658 = vmatpush1.msra.mxu0 %v59
    %659 = vmatprep.subr.mxu0 0.0
    %660 = vmatpush1.msra.mxu0 %v60
    %661 = vmatprep.subr.mxu0 0.0
    %662 = vmatpush1.msra.mxu0 %v61
    %663 = vmatprep.subr.mxu0 0.0
    %664 = vmatpush1.msra.mxu0 0.0
    %665 = vmatprep.subr.mxu0 0.0
    %666 = vmatpush1.msra.mxu0 0.0
    %667 = vmatprep.subr.mxu0 0.0
    %668 = vmatpush1.msra.mxu0 0.0
    %669 = vmatprep.subr.mxu0 0.0
    %670 = vmatpush1.msra.mxu0 0.0
    %671 = vmatprep.subr.mxu0 0.0
    %672 = vmatpush1.msra.mxu0 0.0
    %673 = vmatprep.subr.mxu0 0.0
    %674 = vmatpush1.msra.mxu0 0.0
    %675 = vmatprep.subr.mxu0 0.0
    %676 = vmatpush1.msra.mxu0 0.0
    %677 = vmatprep.subr.mxu0 0.0
    %678 = vmatpush1.msra.mxu0 0.0
    %679 = vmatprep.subr.mxu0 0.0
    %680 = vmatpush1.msra.mxu0 0.0
    %681 = vmatprep.subr.mxu0 0.0
    %682 = vmatpush1.msra.mxu0 0.0
    %683 = vmatprep.subr.mxu0 0.0
    %684 = vmatpush1.msra.mxu0 0.0
    %685 = vmatprep.subr.mxu0 0.0
    %686 = vmatpush1.msra.mxu0 0.0
    %687 = vmatprep.subr.mxu0 0.0
    %688 = vmatpush1.msra.mxu0 0.0
    %689 = vmatprep.subr.mxu0 0.0
    %690 = vmatpush1.msra.mxu0 0.0
    %691 = vmatprep.subr.mxu0 0.0
    %692 = vmatpush1.msra.mxu0 0.0
    %693 = vmatprep.subr.mxu0 0.0
    %694 = vmatpush1.msra.mxu0 0.0
    %695 = vmatprep.mubr.f32.mxu0 0.0
    %696 = vmatmul.mubr.f32.gmra.mrb[0].mxu0 %v553
    %v697 = vpop.f32.mrb[0].mxu0
    %v698 = vadd.f32 0.0, %v697
    %v699 = vpop.f32.mrb[0].mxu0
    %700 = vmatprep.mubr.f32.mxu0 0.0
    %701 = vmatmul.mubr.f32.gmra.mrb[0].mxu0 %v555
    %v702 = vpop.f32.mrb[0].mxu0
    %v703 = vadd.f32 0.0, %v702
    %v704 = vpop.f32.mrb[0].mxu0
    %705 = vdwg.mxu0
    %v706 = vrcp.pop %v698
    %v707 = vmul.f32 %v623, %v706
    %v708 = vrcp.pop %v703
    %v709 = vmul.f32 %v628, %v708
    %v710 = vlaneseq
    %v711 = vshrl.u32 %v710, 7
    %v712 = vsub.s32 0, %v711
    %v713 = vrot.slane %v62, %v712
    %v715 = vsel %vm73, %v707, 0
    %v718 = vsel %vm73, %v709, 0
    %720 = vmatprep.subr.mxu0 0.0
    %721 = vmatpush1.msra.mxu0 %v42
    %722 = vmatprep.subr.mxu0 0.0
    %723 = vmatpush1.msra.mxu0 %v43
    %724 = vmatprep.subr.mxu0 0.0
    %725 = vmatpush1.msra.mxu0 %v44
    %726 = vmatprep.subr.mxu0 0.0
    %727 = vmatpush1.msra.mxu0 %v45
    %728 = vmatprep.subr.mxu0 0.0
    %729 = vmatpush1.msra.mxu0 0.0
    %730 = vmatprep.subr.mxu0 0.0
    %731 = vmatpush1.msra.mxu0 0.0
    %732 = vmatprep.subr.mxu0 0.0
    %733 = vmatpush1.msra.mxu0 0.0
    %734 = vmatprep.subr.mxu0 0.0
    %735 = vmatpush1.msra.mxu0 0.0
    %736 = vmatprep.subr.mxu0 0.0
    %737 = vmatpush1.msra.mxu0 0.0
    %738 = vmatprep.subr.mxu0 0.0
    %739 = vmatpush1.msra.mxu0 0.0
    %740 = vmatprep.subr.mxu0 0.0
    %741 = vmatpush1.msra.mxu0 0.0
    %742 = vmatprep.subr.mxu0 0.0
    %743 = vmatpush1.msra.mxu0 0.0
    %744 = vmatprep.subr.mxu0 0.0
    %745 = vmatpush1.msra.mxu0 0.0
    %746 = vmatprep.subr.mxu0 0.0
    %747 = vmatpush1.msra.mxu0 0.0
    %748 = vmatprep.subr.mxu0 0.0
    %749 = vmatpush1.msra.mxu0 0.0
    %750 = vmatprep.subr.mxu0 0.0
    %751 = vmatpush1.msra.mxu0 0.0
    %752 = vmatprep.subr.mxu0 0.0
    %753 = vmatpush1.msra.mxu0 0.0
    %754 = vmatprep.subr.mxu0 0.0
    %755 = vmatpush1.msra.mxu0 0.0
    %756 = vmatprep.subr.mxu0 0.0
    %757 = vmatpush1.msra.mxu0 0.0
    %758 = vmatprep.subr.mxu0 0.0
    %759 = vmatpush1.msra.mxu0 0.0
    %760 = vmatprep.subr.mxu0 0.0
    %761 = vmatpush1.msra.mxu0 0.0
    %762 = vmatprep.subr.mxu0 0.0
    %763 = vmatpush1.msra.mxu0 0.0
    %764 = vmatprep.subr.mxu0 0.0
    %765 = vmatpush1.msra.mxu0 0.0
    %766 = vmatprep.subr.mxu0 0.0
    %767 = vmatpush1.msra.mxu0 0.0
    %768 = vmatprep.subr.mxu0 0.0
    %769 = vmatpush1.msra.mxu0 0.0
    %770 = vmatprep.subr.mxu0 0.0
    %771 = vmatpush1.msra.mxu0 0.0
    %772 = vmatprep.subr.mxu0 0.0
    %773 = vmatpush1.msra.mxu0 0.0
    %774 = vmatprep.subr.mxu0 0.0
    %775 = vmatpush1.msra.mxu0 0.0
    %776 = vmatprep.subr.mxu0 0.0
    %777 = vmatpush1.msra.mxu0 0.0
    %778 = vmatprep.subr.mxu0 0.0
    %779 = vmatpush1.msra.mxu0 0.0
    %780 = vmatprep.subr.mxu0 0.0
    %781 = vmatpush1.msra.mxu0 0.0
    %782 = vmatprep.subr.mxu0 0.0
    %783 = vmatpush1.msra.mxu0 0.0
    %784 = vmatprep.mubr.f32.mxu0 0.0
    %785 = vmatmul.mubr.f32.gmra.mrb[0].mxu0 %v715
    %v786 = vpop.f32.mrb[0].mxu0
    %v787 = vadd.f32 %v713, %v786
    %v788 = vpop.f32.mrb[0].mxu0
    %789 = vmatprep.mubr.f32.mxu0 0.0
    %790 = vmatmul.mubr.f32.gmra.mrb[0].mxu0 %v718
    %v791 = vpop.f32.mrb[0].mxu0
    %v792 = vadd.f32 %v713, %v791
    %v793 = vpop.f32.mrb[0].mxu0
    %794 = vdwg.mxu0
    %v795 = vadd.f32 %v12, %v787
    %v796 = vadd.f32 %v13, %v792
    %v797 = vsel %vm73, %v795, 0.0
    %798 = vadd.xlane.f32.xlu0 %v797
    %v799 = vpop.xlane.xlu0 %798
    %v800 = vsel %vm73, %v796, 0.0
    %801 = vadd.xlane.f32.xlu0 %v800
    %v802 = vpop.xlane.xlu0 %801
    %v803 = vmul.f32 %v799, 0.03125
    %v804 = vmul.f32 %v802, 0.03125
    %v805 = vsub.f32 %v795, %v803
    %v806 = vsub.f32 %v796, %v804
    %v807 = vmul.f32 %v805, %v805
    %v808 = vmul.f32 %v806, %v806
    %v809 = vsel %vm73, %v807, 0.0
    %810 = vadd.xlane.f32.xlu0 %v809
    %v811 = vpop.xlane.xlu0 %810
    %v812 = vsel %vm73, %v808, 0.0
    %813 = vadd.xlane.f32.xlu0 %v812
    %v814 = vpop.xlane.xlu0 %813
    %v815 = vmul.f32 %v811, 0.03125
    %v816 = vmul.f32 %v814, 0.03125
    %v817 = vadd.f32 %v815, 1e-05
    %v818 = vadd.f32 %v816, 1e-05
    %v819 = vrsqrt.pop %v817
    %v820 = vrsqrt.pop %v818
    %v821 = vmul.f32 %v805, %v819
    %v822 = vmul.f32 %v806, %v820
    %v823 = vlaneseq
    %v824 = vshrl.u32 %v823, 7
    %v825 = vsub.s32 1, %v824
    %v826 = vrot.slane %v62, %v825
    %v827 = vmul.f32 %v821, %v826
    %v828 = vmul.f32 %v822, %v826
    %v829 = vlaneseq
    %v830 = vshrl.u32 %v829, 7
    %v831 = vsub.s32 2, %v830
    %v832 = vrot.slane %v62, %v831
    %v833 = vadd.f32 %v827, %v832
    %v834 = vadd.f32 %v828, %v832
    %835 = vst.msk [vmem:[#allocation2] sm:$0xff] %vm73, %v833
    %836 = vst.msk [vmem:[#allocation2 + $0x8] sm:$0xff] %vm73, %v834
    // Predicated region
    $region10: #{mha_forward.1} parent=1 // pred_check
      _
    $region11: #{mha_forward.1} parent=1 // pred_check_branch
      %838 = sbr.rel (0) target = $region13
    $region12: #{mha_forward.1} parent=1 // pred_region
      %s840 = ssub.s32 256, 256
      %841 = vsyncadd [#allocation3], %s840
      %s842 = sshll.u32 [#allocation2], 4
      %s843 = int_to_ptr.vmem [resolvable:$true] %s842
      %848 = dma.vmem_to_hbm [thread:$0]  %s843, 256, %s2, [#allocation3], 128, 128, 8
    $region13: #{mha_forward.1} parent=1 // pred_fallthru
      _
    // Predicated region
    $region14: #{mha_forward.1} parent=1 // pred_check
      _
    $region15: #{mha_forward.1} parent=1 // pred_check_branch
      %850 = sbr.rel (0) target = $region17
    $region16: #{mha_forward.1} parent=1 // pred_region
      %851 = dma.done [#allocation3], 256
    $region17: #{mha_forward.1} parent=1 // pred_fallthru
      _
    %852 = vsyncpa [#allocation3], 1

</llo_original>
